<compile_context>
chip_gen: v7x
topology: tpu7x:2x2x1
jax: 0.10.0
libtpu: 0.0.40
codegen_flags: <defaults>
</compile_context>

<pallas_src>
import functools

import jax
import jax.numpy as jnp
from jax.experimental import pallas as pl
from jax.experimental.pallas import tpu as pltpu

_LANE = 128
_SUBLANE = 8


def _round_up(x, m):
    return ((x + m - 1) // m) * m


# ----------------------------------------------------------------------------
# Kernel: one GCN layer for a row tile of destination nodes.
#   out_i = epilogue( (A_i @ Z) @ W ),  epilogue(h) = h * s + t  [+ relu]
# With all feature dims padded to 128, (A@Z)@W and A@(Z@W) cost the same on the
# MXU, and this association needs no precomputed Z@W pass.
# ----------------------------------------------------------------------------
def _gcn_layer_kernel(a_ref, z_ref, w_ref, s_ref, t_ref, out_ref, *, apply_relu):
    # a_ref : (TM, Np)     bf16  row tile of normalized adjacency
    # z_ref : (Np, Din)    bf16  all source-node features (resident across the grid)
    # w_ref : (Din, Dout)  bf16  transposed GCN linear weight
    # s_ref : (1, Dout)    f32   folded BatchNorm scale
    # t_ref : (1, Dout)    f32   folded (bias + BatchNorm shift)
    agg = jnp.dot(a_ref[...], z_ref[...],
                  preferred_element_type=jnp.float32)              # (TM, Din) f32
    h = jnp.dot(agg.astype(jnp.bfloat16), w_ref[...],
                preferred_element_type=jnp.float32)                # (TM, Dout) f32
    h = h * s_ref[...] + t_ref[...]                                # bias+BN folded affine
    if apply_relu:
        h = jnp.maximum(h, 0.0)
    out_ref[...] = h.astype(out_ref.dtype)


def _gcn_layer(a_bf16, z_bf16, w_t_bf16, scale, shift, *, apply_relu, out_dtype, tm):
    n_pad = a_bf16.shape[0]
    d_in = z_bf16.shape[1]
    d_out = w_t_bf16.shape[1]
    return pl.pallas_call(
        functools.partial(_gcn_layer_kernel, apply_relu=apply_relu),
        out_shape=jax.ShapeDtypeStruct((n_pad, d_out), out_dtype),
        grid=(n_pad // tm,),
        in_specs=[
            pl.BlockSpec((tm, n_pad), lambda i: (i, 0)),      # A_hat row tile (pipelined)
            pl.BlockSpec((n_pad, d_in), lambda i: (0, 0)),    # features, resident
            pl.BlockSpec((d_in, d_out), lambda i: (0, 0)),    # W^T, resident
            pl.BlockSpec((1, d_out), lambda i: (0, 0)),       # folded BN scale
            pl.BlockSpec((1, d_out), lambda i: (0, 0)),       # folded bias + BN shift
        ],
        out_specs=pl.BlockSpec((tm, d_out), lambda i: (i, 0)),
        compiler_params=pltpu.CompilerParams(
            dimension_semantics=("parallel",),                # shards row tiles across TCs (v7x)
            vmem_limit_bytes=48 * 1024 * 1024,                # safe on v5e/v6e/v7x
        ),
    )(a_bf16, z_bf16, w_t_bf16, scale, shift)


# ----------------------------------------------------------------------------
# Wrapper glue (plain JAX): adjacency normalization, padding, bias/BN folding.
# ----------------------------------------------------------------------------
def _gcn_norm_dense(edge_index, num_nodes):
    """Dense D^{-1/2}(A + I)D^{-1/2}, matching PyG gcn_norm with self-loops."""
    src, dst = edge_index[0], edge_index[1]
    a = jnp.zeros((num_nodes, num_nodes), jnp.float32).at[dst, src].add(1.0)
    a = a + jnp.eye(num_nodes, dtype=jnp.float32)
    deg = a.sum(axis=1)
    dinv = jnp.where(deg > 0.0, jax.lax.rsqrt(deg), 0.0)
    return dinv[:, None] * a * dinv[None, :]


def _fold_bn_bias(bias, gamma, beta, mean, var, eps=1e-5):
    """Fold conv bias + eval-mode BatchNorm into a single per-channel affine."""
    scale = gamma / jnp.sqrt(var + eps)
    shift = (bias - mean) * scale + beta
    return scale, shift


def _choose_tm(n8):
    """Row-tile size: multiple of 8, capped so the double-buffered bf16 A tile stays <~16 MiB."""
    tm = min(512, n8)
    while tm > _SUBLANE and 2 * tm * n8 * 2 > 16 * 1024 * 1024:
        tm //= 2
    return max(_SUBLANE, (tm // _SUBLANE) * _SUBLANE)


def binlex_inner_gnn_forward(x, edge_index, params):
    n, f = x.shape
    h_dim = params["w1"].shape[0]
    o_dim = params["w2"].shape[0]

    # Padded (lane-dense) shapes.
    f_pad = _round_up(f, _LANE)
    h_pad = _round_up(h_dim, _LANE)
    o_pad = _round_up(o_dim, _LANE)
    n8 = _round_up(n, _SUBLANE)
    tm = _choose_tm(n8)
    n_pad = _round_up(n8, tm)

    # Dense normalized adjacency, zero-padded (padded rows/cols contribute nothing).
    a_pad = jnp.zeros((n_pad, n_pad), jnp.float32).at[:n, :n].set(
        _gcn_norm_dense(edge_index, n))
    x_pad = jnp.zeros((n_pad, f_pad), jnp.float32).at[:n, :f].set(
        x.astype(jnp.float32))

    # GCNConv lin.weight is (out, in); kernel consumes (in, out). Zero-pad to 128 lanes.
    w1_t = jnp.zeros((f_pad, h_pad), jnp.float32).at[:f, :h_dim].set(params["w1"].T)
    w2_t = jnp.zeros((h_pad, o_pad), jnp.float32).at[:h_dim, :o_dim].set(params["w2"].T)

    # Fold bias + (eval) BatchNorm into one affine; BN applied only when N > 1,
    # mirroring `if x.size(0) > 1:` in the module.
    if n > 1:
        s1, t1 = _fold_bn_bias(params["b1"], params["bn1_gamma"], params["bn1_beta"],
                               params["bn1_mean"], params["bn1_var"])
        s2, t2 = _fold_bn_bias(params["b2"], params["bn2_gamma"], params["bn2_beta"],
                               params["bn2_mean"], params["bn2_var"])
    else:
        s1, t1 = jnp.ones_like(params["b1"]), params["b1"]
        s2, t2 = jnp.ones_like(params["b2"]), params["b2"]
    s1p = jnp.zeros((1, h_pad), jnp.float32).at[0, :h_dim].set(s1)
    t1p = jnp.zeros((1, h_pad), jnp.float32).at[0, :h_dim].set(t1)
    s2p = jnp.zeros((1, o_pad), jnp.float32).at[0, :o_dim].set(s2)
    t2p = jnp.zeros((1, o_pad), jnp.float32).at[0, :o_dim].set(t2)

    # bf16 MXU inputs, f32 accumulation.
    a_bf = a_pad.astype(jnp.bfloat16)
    x_bf = x_pad.astype(jnp.bfloat16)
    w1_bf = w1_t.astype(jnp.bfloat16)
    w2_bf = w2_t.astype(jnp.bfloat16)

    # Layer 1: aggregate + transform + folded bias/BN + ReLU. Dropout(p=0.3) is identity (eval).
    h1 = _gcn_layer(a_bf, x_bf, w1_bf, s1p, t1p,
                    apply_relu=True, out_dtype=jnp.bfloat16, tm=tm)
    # Layer 2: aggregate + transform + folded bias/BN.
    out_pad = _gcn_layer(a_bf, h1, w2_bf, s2p, t2p,
                         apply_relu=False, out_dtype=jnp.float32, tm=tm)
    return out_pad[:n, :o_dim]


# ----------------------------------------------------------------------------
# Parameter init + references (correctness checks only).
# ----------------------------------------------------------------------------
def init_params(key, node_features_dim, hidden_dim, output_dim):
    k1, k2 = jax.random.split(key)

    def glorot(k, fan_out, fan_in):
        lim = jnp.sqrt(6.0 / (fan_in + fan_out))
        return jax.random.uniform(k, (fan_out, fan_in), jnp.float32, -lim, lim)

    return {
        "w1": glorot(k1, hidden_dim, node_features_dim),     # (H, F) like lin.weight
        "b1": jnp.zeros((hidden_dim,), jnp.float32),
        "bn1_gamma": jnp.ones((hidden_dim,), jnp.float32),
        "bn1_beta": jnp.zeros((hidden_dim,), jnp.float32),
        "bn1_mean": jnp.zeros((hidden_dim,), jnp.float32),
        "bn1_var": jnp.ones((hidden_dim,), jnp.float32),
        "w2": glorot(k2, output_dim, hidden_dim),            # (O, H)
        "b2": jnp.zeros((output_dim,), jnp.float32),
        "bn2_gamma": jnp.ones((output_dim,), jnp.float32),
        "bn2_beta": jnp.zeros((output_dim,), jnp.float32),
        "bn2_mean": jnp.zeros((output_dim,), jnp.float32),
        "bn2_var": jnp.ones((output_dim,), jnp.float32),
    }


def _reference_forward_f32(x, edge_index, params):
    """Pure-JAX full-f32 reference of the module's eval-mode forward."""
    n = x.shape[0]
    a_hat = _gcn_norm_dense(edge_index, n)
    h = a_hat @ (x @ params["w1"].T) + params["b1"]
    if n > 1:
        s = params["bn1_gamma"] / jnp.sqrt(params["bn1_var"] + 1e-5)
        h = (h - params["bn1_mean"]) * s + params["bn1_beta"]
    h = jnp.maximum(h, 0.0)
    h = a_hat @ (h @ params["w2"].T) + params["b2"]
    if n > 1:
        s = params["bn2_gamma"] / jnp.sqrt(params["bn2_var"] + 1e-5)
        h = (h - params["bn2_mean"]) * s + params["bn2_beta"]
    return h


def _reference_forward_bf16(x, edge_index, params):
    """Precision-matched reference mirroring the kernel's numerics:
    bf16 matmul inputs, f32 accumulation, f32 epilogue, bf16 inter-layer activations."""
    n = x.shape[0]
    bf = lambda v: v.astype(jnp.bfloat16)
    a = _gcn_norm_dense(edge_index, n)
    if n > 1:
        s1, t1 = _fold_bn_bias(params["b1"], params["bn1_gamma"], params["bn1_beta"],
                               params["bn1_mean"], params["bn1_var"])
        s2, t2 = _fold_bn_bias(params["b2"], params["bn2_gamma"], params["bn2_beta"],
                               params["bn2_mean"], params["bn2_var"])
    else:
        s1, t1 = jnp.ones_like(params["b1"]), params["b1"]
        s2, t2 = jnp.ones_like(params["b2"]), params["b2"]
    agg = jnp.dot(bf(a), bf(x), preferred_element_type=jnp.float32)
    h = jnp.dot(bf(agg), bf(params["w1"].T), preferred_element_type=jnp.float32)
    h = jnp.maximum(h * s1 + t1, 0.0)
    h = bf(h)
    agg = jnp.dot(bf(a), h, preferred_element_type=jnp.float32)
    out = jnp.dot(bf(agg), bf(params["w2"].T), preferred_element_type=jnp.float32)
    return out * s2 + t2


if __name__ == "__main__":
    NODE_FEATURES_DIM = 32
    HIDDEN_DIM = 32
    OUTPUT_DIM = 16
    NUM_NODES = 16
    NUM_EDGES = 48

    key = jax.random.PRNGKey(0)
    k_x, k_e, k_p = jax.random.split(key, 3)

    x = jax.random.normal(k_x, (NUM_NODES, NODE_FEATURES_DIM), jnp.float32)
    edge_index = jax.random.randint(k_e, (2, NUM_EDGES), 0, NUM_NODES, jnp.int32)
    params = init_params(k_p, NODE_FEATURES_DIM, HIDDEN_DIM, OUTPUT_DIM)

    out = binlex_inner_gnn_forward(x, edge_index, params)
    out = jax.block_until_ready(out)
    assert out.shape == (NUM_NODES, OUTPUT_DIM)

    # Tight check against a reference that mirrors the kernel's bf16-in / f32-accumulate math.
    ref_matched = _reference_forward_bf16(x, edge_index, params)
    assert bool(jnp.allclose(out, ref_matched, atol=1e-3, rtol=1e-3))

    # Loose sanity check against the exact f32 module semantics (bf16 rounding tolerance).
    ref_f32 = _reference_forward_f32(x, edge_index, params)
    assert bool(jnp.allclose(out, ref_f32, atol=3e-1, rtol=2e-1))

    print("KERNEL_OK")
</pallas_src>

<mosaic_0001>
module attributes {stable_mosaic.version = 11 : i64} {
  func.func @_gcn_layer_kernel(%arg0: i32, %arg1: memref<16x16xbf16, #tpu.memory_space<vmem>>, %arg2: memref<16x128xbf16, #tpu.memory_space<vmem>>, %arg3: memref<128x128xbf16, #tpu.memory_space<vmem>>, %arg4: memref<1x128xf32, #tpu.memory_space<vmem>>, %arg5: memref<1x128xf32, #tpu.memory_space<vmem>>, %arg6: memref<16x128xbf16, #tpu.memory_space<vmem>>) attributes {dimension_semantics = [#tpu.dimension_semantics<parallel>], iteration_bounds = array<i64: 1>, scalar_prefetch = 0 : i64, scratch_operands = 0 : i64, tpu.core_type = #tpu.core_type<tc>, window_params = [{transform_indices = @transform_0, window_bounds = array<i64: 16, 16>}, {pipeline_mode = #tpu.pipeline_mode<synchronous>, transform_indices = @transform_1, window_bounds = array<i64: 16, 128>}, {pipeline_mode = #tpu.pipeline_mode<synchronous>, transform_indices = @transform_2, window_bounds = array<i64: 128, 128>}, {pipeline_mode = #tpu.pipeline_mode<synchronous>, transform_indices = @transform_3, window_bounds = array<i64: 1, 128>}, {pipeline_mode = #tpu.pipeline_mode<synchronous>, transform_indices = @transform_4, window_bounds = array<i64: 1, 128>}, {transform_indices = @transform_5, window_bounds = array<i64: 16, 128>}]} {
    %c0 = arith.constant 0 : index
    %c0_0 = arith.constant 0 : index
    %0 = vector.load %arg1[%c0, %c0_0] : memref<16x16xbf16, #tpu.memory_space<vmem>>, vector<16x16xbf16>
    %c0_1 = arith.constant 0 : index
    %c0_2 = arith.constant 0 : index
    %1 = vector.load %arg2[%c0_1, %c0_2] : memref<16x128xbf16, #tpu.memory_space<vmem>>, vector<16x128xbf16>
    %cst = arith.constant dense<0.000000e+00> : vector<16x128xf32>
    %2 = tpu.matmul %0, %1, %cst {dimension_numbers = #tpu.dot_dimension_numbers<[1], [0], [0], [1], [0, 0, 1, 1], [], []>} : vector<16x16xbf16>, vector<16x128xbf16>, vector<16x128xf32> -> vector<16x128xf32>
    %3 = arith.truncf %2 : vector<16x128xf32> to vector<16x128xbf16>
    %c0_3 = arith.constant 0 : index
    %c0_4 = arith.constant 0 : index
    %4 = vector.load %arg3[%c0_3, %c0_4] : memref<128x128xbf16, #tpu.memory_space<vmem>>, vector<128x128xbf16>
    %cst_5 = arith.constant dense<0.000000e+00> : vector<16x128xf32>
    %5 = tpu.matmul %3, %4, %cst_5 {dimension_numbers = #tpu.dot_dimension_numbers<[1], [0], [0], [1], [0, 0, 1, 1], [], []>} : vector<16x128xbf16>, vector<128x128xbf16>, vector<16x128xf32> -> vector<16x128xf32>
    %c0_6 = arith.constant 0 : index
    %c0_7 = arith.constant 0 : index
    %6 = vector.load %arg4[%c0_6, %c0_7] : memref<1x128xf32, #tpu.memory_space<vmem>>, vector<1x128xf32>
    %7 = vector.broadcast %6 : vector<1x128xf32> to vector<16x128xf32>
    %8 = arith.mulf %5, %7 : vector<16x128xf32>
    %c0_8 = arith.constant 0 : index
    %c0_9 = arith.constant 0 : index
    %9 = vector.load %arg5[%c0_8, %c0_9] : memref<1x128xf32, #tpu.memory_space<vmem>>, vector<1x128xf32>
    %10 = vector.broadcast %9 : vector<1x128xf32> to vector<16x128xf32>
    %11 = arith.addf %8, %10 : vector<16x128xf32>
    %cst_10 = arith.constant 0.000000e+00 : f32
    %12 = vector.broadcast %cst_10 : f32 to vector<16x128xf32>
    %13 = arith.maximumf %11, %12 : vector<16x128xf32>
    %14 = arith.truncf %13 : vector<16x128xf32> to vector<16x128xbf16>
    %c0_11 = arith.constant 0 : index
    %c0_12 = arith.constant 0 : index
    %15 = vector.load %arg6[%c0_11, %c0_12] : memref<16x128xbf16, #tpu.memory_space<vmem>>, vector<16x128xbf16>
    tpu.vector_store %arg6[%c0_11, %c0_12], %14 {strides = array<i32>} : memref<16x128xbf16, #tpu.memory_space<vmem>>, vector<16x128xbf16>,
    return
  }
  func.func @transform_0(%arg0: i32) -> (i32, i32) {
    %c0_i32 = arith.constant 0 : i32
    %c0_i32_0 = arith.constant 0 : i32
    return %arg0, %c0_i32 : i32, i32
  }
  func.func @transform_1(%arg0: i32) -> (i32, i32) {
    %c0_i32 = arith.constant 0 : i32
    %c0_i32_0 = arith.constant 0 : i32
    %c0_i32_1 = arith.constant 0 : i32
    return %c0_i32, %c0_i32_0 : i32, i32
  }
  func.func @transform_2(%arg0: i32) -> (i32, i32) {
    %c0_i32 = arith.constant 0 : i32
    %c0_i32_0 = arith.constant 0 : i32
    %c0_i32_1 = arith.constant 0 : i32
    return %c0_i32, %c0_i32_0 : i32, i32
  }
  func.func @transform_3(%arg0: i32) -> (i32, i32) {
    %c0_i32 = arith.constant 0 : i32
    %c0_i32_0 = arith.constant 0 : i32
    %c0_i32_1 = arith.constant 0 : i32
    return %c0_i32, %c0_i32_0 : i32, i32
  }
  func.func @transform_4(%arg0: i32) -> (i32, i32) {
    %c0_i32 = arith.constant 0 : i32
    %c0_i32_0 = arith.constant 0 : i32
    %c0_i32_1 = arith.constant 0 : i32
    return %c0_i32, %c0_i32_0 : i32, i32
  }
  func.func @transform_5(%arg0: i32) -> (i32, i32) {
    %c0_i32 = arith.constant 0 : i32
    %c0_i32_0 = arith.constant 0 : i32
    return %arg0, %c0_i32 : i32, i32
  }
}

</mosaic_0001>

<llo_original>
// kernel: tpu_custom_call.1
$region0: #{tpu_custom_call.1}
  #allocation0 [shape = 'u32[]', space=smem, size = 0x4, offset = 0x4, fixed_abs, tag = 'smem constant byte address 0x4 - core index']
  #allocation1 [shape = 'u32[144,128]{1,0:T(1,128)}', space=vmem, size = 0x12000, scoped, tag = 'internal scratch']
  %s0 = inlined_call_operand.hbm [shape: bf16[16,16], index: 0, kind: input, shape index: {}]
  %s1 = inlined_call_operand.hbm [shape: bf16[16,128], index: 1, kind: input, shape index: {}]
  %s2 = inlined_call_operand.hbm [shape: bf16[128,128], index: 2, kind: input, shape index: {}]
  %s3 = inlined_call_operand.vmem [shape: f32[1,128], index: 3, kind: input, shape index: {}]
  %s4 = inlined_call_operand.vmem [shape: f32[1,128], index: 4, kind: input, shape index: {}]
  %s5 = inlined_call_operand.hbm [shape: bf16[16,128], index: 5, kind: output, shape index: {}]
  %s6 = sld [smem:[#allocation0]]
  $region42: #{tpu_custom_call.1} parent=0
    _
  %s8 = ssub.s32 1, %s6
  %s9 = scalar_select 0, %s8, %s6
  $region1: #{tpu_custom_call.1} parent=0
    #allocation2 [shape = 'u8[4096]{0}', space=vmem, size = 0x1000, scoped, tag = 'input window, operand 0, single buffered']
    #allocation3 [shape = 's32[1]{0}', space=sflag, size = 0x4, scoped, tag = 'scoped memory for tpu_custom_call.1']
    #allocation4 [shape = 's32[1]{0}', space=sflag, size = 0x4, scoped, tag = 'scoped memory for tpu_custom_call.1']
    #allocation5 [shape = 'u8[4096]{0}', space=vmem, size = 0x1000, scoped, tag = 'input window, operand 1, single buffered']
    #allocation6 [shape = 's32[1]{0}', space=sflag, size = 0x4, scoped, tag = 'scoped memory for tpu_custom_call.1']
    #allocation7 [shape = 'u8[32768]{0}', space=vmem, size = 0x8000, scoped, tag = 'input window, operand 2, single buffered']
    #allocation8 [shape = 'u8[4096]{0}', space=vmem, size = 0x1000, scoped, tag = 'output window, operand 0, single buffered']
    %10 = vsyncpa [#allocation3], 0
    %11 = vsyncpa [#allocation6], 0
    %12 = vsyncpa [#allocation4], 0
    // Predicated region
    $region2: #{tpu_custom_call.1} parent=1 // pred_check
      _
    $region3: #{tpu_custom_call.1} parent=1 // pred_check_branch
      %14 = sbr.rel (0) target = $region5
    $region4: #{tpu_custom_call.1} parent=1 // pred_region
      %s16 = ssub.s32 128, 128
      %17 = vsyncadd [#allocation3], %s16
      %s18 = sshll.u32 [#allocation2], 4
      %s19 = int_to_ptr.vmem [resolvable:$true] %s18
      %24 = dma.hbm_to_vmem [thread:$0]  %s0, 128, %s19, [#allocation3], 64, 64, 4
    $region5: #{tpu_custom_call.1} parent=1 // pred_fallthru
      _
    // Predicated region
    $region6: #{tpu_custom_call.1} parent=1 // pred_check
      _
    $region7: #{tpu_custom_call.1} parent=1 // pred_check_branch
      %26 = sbr.rel (0) target = $region9
    $region8: #{tpu_custom_call.1} parent=1 // pred_region
      %s28 = ssub.s32 128, 128
      %29 = vsyncadd [#allocation6], %s28
      %s30 = sshll.u32 [#allocation5], 4
      %s31 = int_to_ptr.vmem [resolvable:$true] %s30
      %36 = dma.hbm_to_vmem [thread:$0]  %s1, 128, %s31, [#allocation6], 64, 64, 4
    $region9: #{tpu_custom_call.1} parent=1 // pred_fallthru
      _
    // Predicated region
    $region10: #{tpu_custom_call.1} parent=1 // pred_check
      _
    $region11: #{tpu_custom_call.1} parent=1 // pred_check_branch
      %38 = sbr.rel (0) target = $region13
    $region12: #{tpu_custom_call.1} parent=1 // pred_region
      %s40 = ssub.s32 1024, 1024
      %41 = vsyncadd [#allocation6], %s40
      %s42 = sshll.u32 [#allocation7], 4
      %s43 = int_to_ptr.vmem [resolvable:$true] %s42
      %48 = dma.hbm_to_vmem [thread:$0]  %s2, 1024, %s43, [#allocation6], 64, 64, 4
    $region13: #{tpu_custom_call.1} parent=1 // pred_fallthru
      _
    // Predicated region
    $region14: #{tpu_custom_call.1} parent=1 // pred_check
      _
    $region15: #{tpu_custom_call.1} parent=1 // pred_check_branch
      %50 = sbr.rel (0) target = $region17
    $region16: #{tpu_custom_call.1} parent=1 // pred_region
      _
    $region17: #{tpu_custom_call.1} parent=1 // pred_fallthru
      _
    // Predicated region
    $region18: #{tpu_custom_call.1} parent=1 // pred_check
      _
    $region19: #{tpu_custom_call.1} parent=1 // pred_check_branch
      %52 = sbr.rel (0) target = $region21
    $region20: #{tpu_custom_call.1} parent=1 // pred_region
      _
    $region21: #{tpu_custom_call.1} parent=1 // pred_fallthru
      _
    // Predicated region
    $region22: #{tpu_custom_call.1} parent=1 // pred_check
      _
    $region23: #{tpu_custom_call.1} parent=1 // pred_check_branch
      %54 = sbr.rel (0) target = $region25
    $region24: #{tpu_custom_call.1} parent=1 // pred_region
      %55 = dma.done [#allocation3], 128
    $region25: #{tpu_custom_call.1} parent=1 // pred_fallthru
      _
    // Predicated region
    $region26: #{tpu_custom_call.1} parent=1 // pred_check
      _
    $region27: #{tpu_custom_call.1} parent=1 // pred_check_branch
      %57 = sbr.rel (0) target = $region29
    $region28: #{tpu_custom_call.1} parent=1 // pred_region
      %58 = dma.done [#allocation6], 128
    $region29: #{tpu_custom_call.1} parent=1 // pred_fallthru
      _
    // Predicated region
    $region30: #{tpu_custom_call.1} parent=1 // pred_check
      _
    $region31: #{tpu_custom_call.1} parent=1 // pred_check_branch
      %60 = sbr.rel (0) target = $region33
    $region32: #{tpu_custom_call.1} parent=1 // pred_region
      %61 = dma.done [#allocation6], 1024
    $region33: #{tpu_custom_call.1} parent=1 // pred_fallthru
      _
    %v63 = vld [vmem:[#allocation2] sm:$0xf]
    %v64 = vld [vmem:[#allocation2 + $0x4] sm:$0xf]
    %v65 = vld [vmem:[#allocation5] sm:$0xf]
    %v66 = vld [vmem:[#allocation5 + $0x4] sm:$0xf]
    %v69 = vunpack.c.l.b16 %v63
    %v70 = vunpack.c.l.b16 %v64
    %v71 = vpack.c.b16 %v70, %v69
    %v74 = vunpack.c.l.b16 %v65
    %v75 = vunpack.c.l.b16 %v66
    %v76 = vpack.c.b16 %v75, %v74
    %vm78 = vcmask 130048
    %v80 = vsel %vm78, %v71, 0
    %82 = vmatprep.subr.bf16.mxu0 0
    %83 = vmatpush1.bf16.msra.mxu0 %v76
    %84 = vmatprep.subr.bf16.mxu0 0
    %85 = vmatpush1.bf16.msra.mxu0 0
    %86 = vmatprep.subr.bf16.mxu0 0
    %87 = vmatpush1.bf16.msra.mxu0 0
    %88 = vmatprep.subr.bf16.mxu0 0
    %89 = vmatpush1.bf16.msra.mxu0 0
    %90 = vmatprep.subr.bf16.mxu0 0
    %91 = vmatpush1.bf16.msra.mxu0 0
    %92 = vmatprep.subr.bf16.mxu0 0
    %93 = vmatpush1.bf16.msra.mxu0 0
    %94 = vmatprep.subr.bf16.mxu0 0
    %95 = vmatpush1.bf16.msra.mxu0 0
    %96 = vmatprep.subr.bf16.mxu0 0
    %97 = vmatpush1.bf16.msra.mxu0 0
    %98 = vmatprep.subr.bf16.mxu0 0
    %99 = vmatpush1.bf16.msra.mxu0 0
    %100 = vmatprep.subr.bf16.mxu0 0
    %101 = vmatpush1.bf16.msra.mxu0 0
    %102 = vmatprep.subr.bf16.mxu0 0
    %103 = vmatpush1.bf16.msra.mxu0 0
    %104 = vmatprep.subr.bf16.mxu0 0
    %105 = vmatpush1.bf16.msra.mxu0 0
    %106 = vmatprep.subr.bf16.mxu0 0
    %107 = vmatpush1.bf16.msra.mxu0 0
    %108 = vmatprep.subr.bf16.mxu0 0
    %109 = vmatpush1.bf16.msra.mxu0 0
    %110 = vmatprep.subr.bf16.mxu0 0
    %111 = vmatpush1.bf16.msra.mxu0 0
    %112 = vmatprep.subr.bf16.mxu0 0
    %113 = vmatpush1.bf16.msra.mxu0 0
    %114 = vmatprep.mubr.bf16.mxu0 0
    %115 = vmatmul.mubr.bf16.gmra.mrb[0].mxu0 %v80
    %v116 = vpop.f32.mrb[0].mxu0
    %v117 = vadd.f32 0.0, %v116
    %v118 = vpop.f32.mrb[0].mxu0
    %v119 = vpop.f32.mrb[0].mxu0
    %v120 = vadd.f32 0.0, %v119
    %v121 = vpop.f32.mrb[0].mxu0
    %122 = vdwg.mxu0
    %v123 = vpack.c.bf16 %v120, %v117
    %v124 = vld [vmem:[#allocation7] sm:$0xf]
    %v125 = vld [vmem:[#allocation7 + $0x4] sm:$0xf]
    %v126 = vld [vmem:[#allocation7 + $0x8] sm:$0xf]
    %v127 = vld [vmem:[#allocation7 + $0xc] sm:$0xf]
    %v128 = vld [vmem:[#allocation7 + $0x10] sm:$0xf]
    %v129 = vld [vmem:[#allocation7 + $0x14] sm:$0xf]
    %v130 = vld [vmem:[#allocation7 + $0x18] sm:$0xf]
    %v131 = vld [vmem:[#allocation7 + $0x1c] sm:$0xf]
    %v132 = vld [vmem:[#allocation7 + $0x20] sm:$0xf]
    %v133 = vld [vmem:[#allocation7 + $0x24] sm:$0xf]
    %v134 = vld [vmem:[#allocation7 + $0x28] sm:$0xf]
    %v135 = vld [vmem:[#allocation7 + $0x2c] sm:$0xf]
    %v136 = vld [vmem:[#allocation7 + $0x30] sm:$0xf]
    %v137 = vld [vmem:[#allocation7 + $0x34] sm:$0xf]
    %v138 = vld [vmem:[#allocation7 + $0x38] sm:$0xf]
    %v139 = vld [vmem:[#allocation7 + $0x3c] sm:$0xf]
    %v156 = vunpack.c.l.b16 %v124
    %v157 = vunpack.c.l.b16 %v125
    %v158 = vunpack.c.l.b16 %v126
    %v159 = vunpack.c.l.b16 %v127
    %v160 = vunpack.c.l.b16 %v128
    %v161 = vunpack.c.l.b16 %v129
    %v162 = vunpack.c.l.b16 %v130
    %v163 = vunpack.c.l.b16 %v131
    %v164 = vunpack.c.l.b16 %v132
    %v165 = vunpack.c.l.b16 %v133
    %v166 = vunpack.c.l.b16 %v134
    %v167 = vunpack.c.l.b16 %v135
    %v168 = vunpack.c.l.b16 %v136
    %v169 = vunpack.c.l.b16 %v137
    %v170 = vunpack.c.l.b16 %v138
    %v171 = vunpack.c.l.b16 %v139
    %v172 = vpack.c.b16 %v157, %v156
    %v173 = vpack.c.b16 %v159, %v158
    %v174 = vpack.c.b16 %v161, %v160
    %v175 = vpack.c.b16 %v163, %v162
    %v176 = vpack.c.b16 %v165, %v164
    %v177 = vpack.c.b16 %v167, %v166
    %v178 = vpack.c.b16 %v169, %v168
    %v179 = vpack.c.b16 %v171, %v170
    %188 = vmatprep.subr.bf16.mxu0 0
    %189 = vmatpush1.bf16.msra.mxu0 %v172
    %190 = vmatprep.subr.bf16.mxu0 0
    %191 = vmatpush1.bf16.msra.mxu0 %v173
    %192 = vmatprep.subr.bf16.mxu0 0
    %193 = vmatpush1.bf16.msra.mxu0 %v174
    %194 = vmatprep.subr.bf16.mxu0 0
    %195 = vmatpush1.bf16.msra.mxu0 %v175
    %196 = vmatprep.subr.bf16.mxu0 0
    %197 = vmatpush1.bf16.msra.mxu0 %v176
    %198 = vmatprep.subr.bf16.mxu0 0
    %199 = vmatpush1.bf16.msra.mxu0 %v177
    %200 = vmatprep.subr.bf16.mxu0 0
    %201 = vmatpush1.bf16.msra.mxu0 %v178
    %202 = vmatprep.subr.bf16.mxu0 0
    %203 = vmatpush1.bf16.msra.mxu0 %v179
    %204 = vmatprep.subr.bf16.mxu0 0
    %205 = vmatpush1.bf16.msra.mxu0 0
    %206 = vmatprep.subr.bf16.mxu0 0
    %207 = vmatpush1.bf16.msra.mxu0 0
    %208 = vmatprep.subr.bf16.mxu0 0
    %209 = vmatpush1.bf16.msra.mxu0 0
    %210 = vmatprep.subr.bf16.mxu0 0
    %211 = vmatpush1.bf16.msra.mxu0 0
    %212 = vmatprep.subr.bf16.mxu0 0
    %213 = vmatpush1.bf16.msra.mxu0 0
    %214 = vmatprep.subr.bf16.mxu0 0
    %215 = vmatpush1.bf16.msra.mxu0 0
    %216 = vmatprep.subr.bf16.mxu0 0
    %217 = vmatpush1.bf16.msra.mxu0 0
    %218 = vmatprep.subr.bf16.mxu0 0
    %219 = vmatpush1.bf16.msra.mxu0 0
    %220 = vmatprep.mubr.bf16.mxu0 0
    %221 = vmatmul.mubr.bf16.gmra.mrb[0].mxu0 %v123
    %v222 = vpop.f32.mrb[0].mxu0
    %v223 = vadd.f32 0.0, %v222
    %v224 = vpop.f32.mrb[0].mxu0
    %v225 = vpop.f32.mrb[0].mxu0
    %v226 = vadd.f32 0.0, %v225
    %v227 = vpop.f32.mrb[0].mxu0
    %228 = vdwg.mxu0
    %v229 = vld [vmem:[%s3] sm:$0x1]
    %v231 = vlaneseq
    %v232 = vshrl.u32 %v231, 7
    %v233 = vsub.s32 0, %v232
    %v234 = vrot.slane %v229, %v233
    %v236 = vmul.f32 %v223, %v234
    %v237 = vmul.f32 %v226, %v234
    %v238 = vld [vmem:[%s4] sm:$0x1]
    %v240 = vlaneseq
    %v241 = vshrl.u32 %v240, 7
    %v242 = vsub.s32 0, %v241
    %v243 = vrot.slane %v238, %v242
    %v245 = vadd.f32 %v236, %v243
    %v246 = vadd.f32 %v237, %v243
    %v247 = vmax.f32 %v245, 0.0
    %v248 = vmax.f32 %v246, 0.0
    %v249 = vpack.c.bf16 %v248, %v247
    %v251 = vunpack.c.l.b16 %v249
    %v252 = vunpack.c.h.b16 %v249
    %v253 = vpack.c.b16 %v251, %v251
    %v254 = vpack.c.b16 %v252, %v252
    %257 = vst [vmem:[#allocation8] sm:$0xf] %v253
    %258 = vst [vmem:[#allocation8 + $0x4] sm:$0xf] %v254
    // Predicated region
    $region34: #{tpu_custom_call.1} parent=1 // pred_check
      _
    $region35: #{tpu_custom_call.1} parent=1 // pred_check_branch
      %260 = sbr.rel (0) target = $region37
    $region36: #{tpu_custom_call.1} parent=1 // pred_region
      %s262 = ssub.s32 128, 128
      %263 = vsyncadd [#allocation4], %s262
      %s264 = sshll.u32 [#allocation8], 4
      %s265 = int_to_ptr.vmem [resolvable:$true] %s264
      %270 = dma.vmem_to_hbm [thread:$0]  %s265, 128, %s5, [#allocation4], 64, 64, 4
    $region37: #{tpu_custom_call.1} parent=1 // pred_fallthru
      _
    // Predicated region
    $region38: #{tpu_custom_call.1} parent=1 // pred_check
      _
    $region39: #{tpu_custom_call.1} parent=1 // pred_check_branch
      %272 = sbr.rel (0) target = $region41
    $region40: #{tpu_custom_call.1} parent=1 // pred_region
      %273 = dma.done [#allocation4], 128
    $region41: #{tpu_custom_call.1} parent=1 // pred_fallthru
      _
    %274 = vsyncpa [#allocation3], 1
    %275 = vsyncpa [#allocation6], 1
    %276 = vsyncpa [#allocation4], 1

</llo_original>
